<compile_context>
chip_gen: v7x
topology: tpu7x:2x2x1
jax: 0.10.0
libtpu: 0.0.40
codegen_flags: <defaults>
</compile_context>

<pallas_src>
import math

import numpy as np
import jax
import jax.numpy as jnp
from jax import lax
from jax.experimental import pallas as pl
from jax.experimental.pallas import tpu as pltpu


# ---------------------------------------------------------------------------
# Pallas kernel: fused (deconv o conv) GEMM + folded-BN/bias + ReLU epilogue.
# ---------------------------------------------------------------------------
def _fused_deconv_conv_bn_relu_kernel(x_ref, w_ref, scale_ref, shift_ref, o_ref):
    # x_ref:     (1, tile_m, K)  im2col'd padded-input windows, K = 8*(Cin+1)
    # w_ref:     (K, N)          fused ConvTranspose∘Conv weights, N = 8*Cout
    # scale_ref: (1, N)          folded BatchNorm scale (per output column)
    # shift_ref: (1, N)          folded BatchNorm shift + conv-bias
    acc = jnp.dot(x_ref[0], w_ref[...], preferred_element_type=jnp.float32)
    out = jnp.maximum(acc * scale_ref[...] + shift_ref[...], 0.0)
    o_ref[0] = out.astype(o_ref.dtype)


# ---------------------------------------------------------------------------
# Host-side weight fusion: ConvTranspose3d(2,2) followed by Conv3d(3, p=1).
# ---------------------------------------------------------------------------
def _fuse_weights(w_dec, b_dec, w_conv):
    """Returns W_comb of shape (8*(Cin+1), 8*Cout).

    Rows ordered (i, j, k, ch): window voxel (i,j,k) in {0,1}^3 of a 2x2x2
    window of the 1-voxel-padded, ones-channel-augmented input.
    Cols ordered (r, s, t, q): output sub-position (r,s,t) in {0,1}^3 of the
    corresponding 2x2x2 output group, output channel q.
    Output group u (per dim) reads padded-input rows {u, u+1} and produces
    output rows {2u-1, 2u} (invalid edge rows are sliced away in the wrapper).
    """
    Cin, Cout = w_dec.shape[0], w_dec.shape[1]
    # Per-dim coupling table A[r, i, conv_tap(delta+1), deconv_tap t]:
    # output sub-position r reads window position i through (conv tap, deconv tap).
    A = np.zeros((2, 2, 3, 2), np.float32)
    A[0, 0, 0, 0] = 1.0   # r=0: delta=-1 -> (i=0, t=0)
    A[0, 0, 1, 1] = 1.0   # r=0: delta= 0 -> (i=0, t=1)
    A[0, 1, 2, 0] = 1.0   # r=0: delta=+1 -> (i=1, t=0)
    A[1, 0, 0, 1] = 1.0   # r=1: delta=-1 -> (i=0, t=1)
    A[1, 1, 1, 0] = 1.0   # r=1: delta= 0 -> (i=1, t=0)
    A[1, 1, 2, 1] = 1.0   # r=1: delta=+1 -> (i=1, t=1)
    A = jnp.asarray(A)

    # Augment the deconv weight with a constant-ones channel carrying the
    # deconv bias.  The ones channel is zero in the padding halo, so the
    # Conv3d zero-padding boundary behaviour is reproduced exactly.
    bias_ch = jnp.broadcast_to(b_dec[None, :, None, None, None], (1, Cout, 2, 2, 2))
    w_aug = jnp.concatenate([w_dec, bias_ch], axis=0)        # (Cin+1, Cout, 2,2,2)

    w = jnp.einsum("riad,sjbe,tkcf,podef,qoabc->ijkprstq",
                   A, A, A, w_aug, w_conv,
                   precision=lax.Precision.HIGHEST)
    return w.reshape(8 * (Cin + 1), 8 * Cout)


# ---------------------------------------------------------------------------
# Forward wrapper.
# ---------------------------------------------------------------------------
def deconv3d_block_forward(x, params, *, eps=1e-5, tile_m=64):
    """x: (B, Cin, D, H, W) float32.  params mirrors the PyTorch module:
    w_dec (Cin, Cout, 2,2,2), b_dec (Cout,), w_conv (Cout, Cout, 3,3,3),
    b_conv (Cout,), gamma/beta/running_mean/running_var (Cout,).
    Returns (B, Cout, 2D, 2H, 2W)."""
    B, Cin, D, H, W = x.shape
    Cout = params["w_dec"].shape[1]
    Cp = Cin + 1
    Kc, Nc = 8 * Cp, 8 * Cout
    Dg, Hg, Wg = D + 1, H + 1, W + 1
    Mg = Dg * Hg * Wg

    # ---- weight fusion + BN/bias folding (one-time host-side prep) ---------
    # TODO(synk): BatchNorm3d here uses running statistics (inference mode);
    # training-mode batch statistics would need a cross-batch reduction pass.
    w_fused = _fuse_weights(params["w_dec"], params["b_dec"], params["w_conv"])
    scale = params["gamma"] / jnp.sqrt(params["running_var"] + eps)
    shift = params["beta"] - params["running_mean"] * scale + params["b_conv"] * scale
    scale8 = jnp.tile(scale, 8).reshape(1, Nc)
    shift8 = jnp.tile(shift, 8).reshape(1, Nc)

    # ---- im2col of the 1-voxel-padded, ones-augmented input (layout only) --
    x_cl = jnp.transpose(x, (0, 2, 3, 4, 1))                         # (B,D,H,W,Cin)
    xa = jnp.concatenate([x_cl, jnp.ones((B, D, H, W, 1), x.dtype)], axis=-1)
    xp = jnp.pad(xa, ((0, 0), (1, 1), (1, 1), (1, 1), (0, 0)))       # (B,D+2,H+2,W+2,Cp)
    wins = [xp[:, i:i + Dg, j:j + Hg, k:k + Wg, :]
            for i in range(2) for j in range(2) for k in range(2)]
    win = jnp.concatenate(wins, axis=-1).reshape(B, Mg, Kc)          # (B, Mg, 8*Cp)
    # TODO(synk): for very large Cin, gather the 8 windows in-kernel from the
    # padded input instead of this wrapper im2col to avoid the 8x HBM expansion.

    # Pad the GEMM row count to a multiple of tile_m ((8,128) block rule).
    def _round_up(a, b):
        return (a + b - 1) // b * b

    tile_m = max(8, (min(int(tile_m), _round_up(Mg, 8)) // 8) * 8)
    Mp = _round_up(Mg, tile_m)
    if Mp != Mg:
        win = jnp.pad(win, ((0, 0), (0, Mp - Mg), (0, 0)))

    grid = (B, Mp // tile_m)
    flops = 2 * B * Mp * Kc * Nc
    bytes_accessed = 4 * (B * Mp * Kc + Kc * Nc + B * Mp * Nc + 2 * Nc)
    vmem_need = 4 * (2 * tile_m * Kc + 2 * tile_m * Nc + 2 * Kc * Nc + 4 * Nc)
    vmem_limit = int(min(100 * 2 ** 20, max(16 * 2 ** 20, 2 * vmem_need)))

    out = pl.pallas_call(
        _fused_deconv_conv_bn_relu_kernel,
        out_shape=jax.ShapeDtypeStruct((B, Mp, Nc), x.dtype),
        grid_spec=pltpu.PrefetchScalarGridSpec(
            num_scalar_prefetch=0,
            grid=grid,
            in_specs=[
                pl.BlockSpec((1, tile_m, Kc), lambda b, m: (b, m, 0)),   # windows
                pl.BlockSpec((Kc, Nc), lambda b, m: (0, 0)),             # fused W
                pl.BlockSpec((1, Nc), lambda b, m: (0, 0)),              # scale
                pl.BlockSpec((1, Nc), lambda b, m: (0, 0)),              # shift
            ],
            out_specs=pl.BlockSpec((1, tile_m, Nc), lambda b, m: (b, m, 0)),
        ),
        compiler_params=pltpu.CompilerParams(
            dimension_semantics=("parallel", "parallel"),
            vmem_limit_bytes=vmem_limit),
        cost_estimate=pl.CostEstimate(flops=flops, transcendentals=0,
                                      bytes_accessed=bytes_accessed),
    )(win, w_fused, scale8, shift8)

    # ---- un-interleave 2x2x2 groups back to NCDHW (layout plumbing) --------
    out = out[:, :Mg, :].reshape(B, Dg, Hg, Wg, 2, 2, 2, Cout)
    out = jnp.transpose(out, (0, 1, 4, 2, 5, 3, 6, 7))
    out = out.reshape(B, 2 * Dg, 2 * Hg, 2 * Wg, Cout)
    out = out[:, 1:1 + 2 * D, 1:1 + 2 * H, 1:1 + 2 * W, :]
    return jnp.transpose(out, (0, 4, 1, 2, 3))                       # NCDHW


# ---------------------------------------------------------------------------
# Pure-JAX reference mirroring the PyTorch forward (inference-mode BN).
# ---------------------------------------------------------------------------
def _reference(x, params, *, eps=1e-5):
    B, Cin, D, H, W = x.shape
    Cout = params["w_dec"].shape[1]
    hp = lax.Precision.HIGHEST

    # ConvTranspose3d(k=2, s=2, p=0)
    y = jnp.einsum("bcdhw,coijk->bodihjwk", x, params["w_dec"], precision=hp)
    y = y.reshape(B, Cout, 2 * D, 2 * H, 2 * W)
    y = y + params["b_dec"][None, :, None, None, None]

    # Conv3d(k=3, s=1, p=1)
    y = lax.conv_general_dilated(
        y, params["w_conv"], window_strides=(1, 1, 1),
        padding=((1, 1), (1, 1), (1, 1)),
        dimension_numbers=("NCDHW", "OIDHW", "NCDHW"),
        precision=hp)
    y = y + params["b_conv"][None, :, None, None, None]

    # BatchNorm3d (eval) + ReLU
    scale = params["gamma"] / jnp.sqrt(params["running_var"] + eps)
    shift = params["beta"] - params["running_mean"] * scale
    y = y * scale[None, :, None, None, None] + shift[None, :, None, None, None]
    return jnp.maximum(y, 0.0)


if __name__ == "__main__":
    B, Cin, Cout, D, H, W = 2, 8, 32, 4, 4, 4

    key = jax.random.PRNGKey(0)
    ks = jax.random.split(key, 9)
    bd = 1.0 / math.sqrt(Cin * 8)       # ConvTranspose3d default init bound
    bc = 1.0 / math.sqrt(Cout * 27)     # Conv3d default init bound

    params = {
        "w_dec": jax.random.uniform(ks[0], (Cin, Cout, 2, 2, 2), jnp.float32, -bd, bd),
        "b_dec": jax.random.uniform(ks[1], (Cout,), jnp.float32, -bd, bd),
        "w_conv": jax.random.uniform(ks[2], (Cout, Cout, 3, 3, 3), jnp.float32, -bc, bc),
        "b_conv": jax.random.uniform(ks[3], (Cout,), jnp.float32, -bc, bc),
        "gamma": jax.random.uniform(ks[4], (Cout,), jnp.float32, 0.5, 1.5),
        "beta": jax.random.uniform(ks[5], (Cout,), jnp.float32, -0.5, 0.5),
        "running_mean": jax.random.uniform(ks[6], (Cout,), jnp.float32, -0.5, 0.5),
        "running_var": jax.random.uniform(ks[7], (Cout,), jnp.float32, 0.5, 1.5),
    }
    x = jax.random.normal(ks[8], (B, Cin, D, H, W), jnp.float32)

    fwd = jax.jit(deconv3d_block_forward)
    out = jax.block_until_ready(fwd(x, params))
    ref = _reference(x, params)

    assert out.shape == (B, Cout, 2 * D, 2 * H, 2 * W), out.shape
    max_err = float(jnp.max(jnp.abs(out - ref)))
    assert jnp.allclose(out, ref, atol=2e-3, rtol=2e-3), f"max abs err = {max_err}"

    print("KERNEL_OK")
</pallas_src>

<mosaic_0001>
module attributes {stable_mosaic.version = 11 : i64} {
  func.func @_fused_deconv_conv_bn_relu_kernel(%arg0: i32, %arg1: i32, %arg2: memref<1x64x72xf32, #tpu.memory_space<vmem>>, %arg3: memref<72x256xf32, #tpu.memory_space<vmem>>, %arg4: memref<1x256xf32, #tpu.memory_space<vmem>>, %arg5: memref<1x256xf32, #tpu.memory_space<vmem>>, %arg6: memref<1x64x256xf32, #tpu.memory_space<vmem>>) attributes {dimension_semantics = [#tpu.dimension_semantics<parallel>, #tpu.dimension_semantics<parallel>], iteration_bounds = array<i64: 2, 2>, scalar_prefetch = 0 : i64, scratch_operands = 0 : i64, tpu.core_type = #tpu.core_type<tc>, window_params = [{transform_indices = @transform_0, window_bounds = array<i64: 1, 64, 72>}, {pipeline_mode = #tpu.pipeline_mode<synchronous>, transform_indices = @transform_1, window_bounds = array<i64: 72, 256>}, {pipeline_mode = #tpu.pipeline_mode<synchronous>, transform_indices = @transform_2, window_bounds = array<i64: 1, 256>}, {pipeline_mode = #tpu.pipeline_mode<synchronous>, transform_indices = @transform_3, window_bounds = array<i64: 1, 256>}, {transform_indices = @transform_4, window_bounds = array<i64: 1, 64, 256>}]} {
    %c0 = arith.constant 0 : index
    %c0_0 = arith.constant 0 : index
    %c0_1 = arith.constant 0 : index
    %0 = vector.load %arg2[%c0, %c0_0, %c0_1] : memref<1x64x72xf32, #tpu.memory_space<vmem>>, vector<1x64x72xf32>
    %1 = vector.shape_cast %0 : vector<1x64x72xf32> to vector<64x72xf32>
    %c0_2 = arith.constant 0 : index
    %c0_3 = arith.constant 0 : index
    %2 = vector.load %arg3[%c0_2, %c0_3] : memref<72x256xf32, #tpu.memory_space<vmem>>, vector<72x256xf32>
    %cst = arith.constant dense<0.000000e+00> : vector<64x256xf32>
    %3 = tpu.matmul %1, %2, %cst {dimension_numbers = #tpu.dot_dimension_numbers<[1], [0], [0], [1], [0, 0, 1, 1], [], []>} : vector<64x72xf32>, vector<72x256xf32>, vector<64x256xf32> -> vector<64x256xf32>
    %c0_4 = arith.constant 0 : index
    %c0_5 = arith.constant 0 : index
    %4 = vector.load %arg4[%c0_4, %c0_5] : memref<1x256xf32, #tpu.memory_space<vmem>>, vector<1x256xf32>
    %5 = vector.broadcast %4 : vector<1x256xf32> to vector<64x256xf32>
    %6 = arith.mulf %3, %5 : vector<64x256xf32>
    %c0_6 = arith.constant 0 : index
    %c0_7 = arith.constant 0 : index
    %7 = vector.load %arg5[%c0_6, %c0_7] : memref<1x256xf32, #tpu.memory_space<vmem>>, vector<1x256xf32>
    %8 = vector.broadcast %7 : vector<1x256xf32> to vector<64x256xf32>
    %9 = arith.addf %6, %8 : vector<64x256xf32>
    %cst_8 = arith.constant 0.000000e+00 : f32
    %10 = vector.broadcast %cst_8 : f32 to vector<64x256xf32>
    %11 = arith.maximumf %9, %10 : vector<64x256xf32>
    %c0_9 = arith.constant 0 : index
    %c0_10 = arith.constant 0 : index
    %c0_11 = arith.constant 0 : index
    %12 = vector.load %arg6[%c0_9, %c0_10, %c0_11] : memref<1x64x256xf32, #tpu.memory_space<vmem>>, vector<1x64x256xf32>
    %13 = vector.shape_cast %12 : vector<1x64x256xf32> to vector<64x256xf32>
    %14 = vector.shape_cast %11 : vector<64x256xf32> to vector<1x64x256xf32>
    tpu.vector_store %arg6[%c0_9, %c0_10, %c0_11], %14 {strides = array<i32>} : memref<1x64x256xf32, #tpu.memory_space<vmem>>, vector<1x64x256xf32>,
    return
  }
  func.func @transform_0(%arg0: i32, %arg1: i32) -> (i32, i32, i32) {
    %c0_i32 = arith.constant 0 : i32
    %c0_i32_0 = arith.constant 0 : i32
    return %arg0, %arg1, %c0_i32 : i32, i32, i32
  }
  func.func @transform_1(%arg0: i32, %arg1: i32) -> (i32, i32) {
    %c0_i32 = arith.constant 0 : i32
    %c0_i32_0 = arith.constant 0 : i32
    %c0_i32_1 = arith.constant 0 : i32
    return %c0_i32, %c0_i32_0 : i32, i32
  }
  func.func @transform_2(%arg0: i32, %arg1: i32) -> (i32, i32) {
    %c0_i32 = arith.constant 0 : i32
    %c0_i32_0 = arith.constant 0 : i32
    %c0_i32_1 = arith.constant 0 : i32
    return %c0_i32, %c0_i32_0 : i32, i32
  }
  func.func @transform_3(%arg0: i32, %arg1: i32) -> (i32, i32) {
    %c0_i32 = arith.constant 0 : i32
    %c0_i32_0 = arith.constant 0 : i32
    %c0_i32_1 = arith.constant 0 : i32
    return %c0_i32, %c0_i32_0 : i32, i32
  }
  func.func @transform_4(%arg0: i32, %arg1: i32) -> (i32, i32, i32) {
    %c0_i32 = arith.constant 0 : i32
    %c0_i32_0 = arith.constant 0 : i32
    return %arg0, %arg1, %c0_i32 : i32, i32, i32
  }
}

</mosaic_0001>

<llo_original>
// kernel: tile.13
$region0: #{tile.13}
  #allocation0 [shape = 's32[1]{0}', space=sflag, size = 0x4, scoped, tag = 'scoped memory for tile.13']
  %s0 = inlined_call_operand.vmem [shape: f32[32], index: 0, kind: input, shape index: {}]
  %s1 = inlined_call_operand.vmem [shape: f32[8,32], index: 1, kind: output, shape index: {}]
  // Predicated region
  $region2: #{tile.13} parent=0 // pred_check
    _
  $region3: #{tile.13} parent=0 // pred_check_branch
    %3 = sbr.rel (0) target = $region5
  $region4: #{tile.13} parent=0 // pred_region
    _
  $region5: #{tile.13} parent=0 // pred_fallthru
    _
  %v4 = vld [vmem:[%s0] ss:$0 sm:$0xff]
  %5 = vst [vmem:[%s1] sm:$0xff] %v4

// kernel: tile.14
$region0: #{tile.14}
  %s0 = inlined_call_operand.vmem [shape: f32[8,32], index: 0, kind: input, shape index: {}]
  %s1 = inlined_call_operand.vmem [shape: f32[1,256], index: 1, kind: output, shape index: {}]
  $region1: #{tile.14} parent=0
    #allocation0 [shape = 'u8[8192]{0}', space=vmem, size = 0x2000, scoped, tag = 'scoped mem for output reshape']
    %s2 = smov 3
    %v3 = vld [vmem:[%s0] ss:$4 sm:%s2]
    %vm4 = vcmask 261120
    %5 = vst.msk [vmem:[#allocation0] ss:$8 sm:$0x3] %vm4, %v3
    %s6 = scalar_lea.vmem %s0, 3
    %s7 = smov 3
    %v8 = vld [vmem:[%s6] ss:$4 sm:%s7]
    %9 = vrot.lane.b32.xlu0 %v8, 96
    %v10 = vpop.permute.xlu0 %9
    %vm11 = vcmask 1048320
    %12 = vst.msk [vmem:[#allocation0] ss:$8 sm:$0x3] %vm11, %v10
    %s13 = scalar_lea.vmem %s0, 2
    %s14 = smov 3
    %v15 = vld [vmem:[%s13] ss:$4 sm:%s14]
    %16 = vrot.lane.b32.xlu0 %v15, 64
    %v17 = vpop.permute.xlu0 %16
    %vm18 = vcmask 785920
    %19 = vst.msk [vmem:[#allocation0] ss:$8 sm:$0x3] %vm18, %v17
    %s20 = scalar_lea.vmem %s0, 1
    %s21 = smov 3
    %v22 = vld [vmem:[%s20] ss:$4 sm:%s21]
    %23 = vrot.lane.b32.xlu0 %v22, 32
    %v24 = vpop.permute.xlu0 %23
    %vm25 = vcmask 523520
    %26 = vst.msk [vmem:[#allocation0] ss:$8 sm:$0x3] %vm25, %v24
    %s28 = sshllo.u32 0, 1
    %v30 = vld [vmem:[#allocation0] sm:%s28]
    %s31 = sshllo.u32 0, 1
    %32 = vst [vmem:[%s1] sm:%s31] %v30
    %s33 = scalar_lea.vmem [#allocation0], 8
    %v34 = vld [vmem:[%s33] sm:%s28]
    %s35 = sshllo.u32 0, 1
    %s36 = scalar_lea.vmem %s1, 1
    %37 = vst [vmem:[%s36] sm:%s35] %v34

// kernel: deconv3d_block_forward.1
$region0: #{deconv3d_block_forward.1}
  #allocation0 [shape = 'u32[]', space=smem, size = 0x4, offset = 0x4, fixed_abs, tag = 'smem constant byte address 0x4 - core index']
  #allocation1 [shape = 'u32[144,128]{1,0:T(1,128)}', space=vmem, size = 0x12000, scoped, tag = 'internal scratch']
  %s0 = inlined_call_operand.vmem [shape: f32[2,128,72], index: 0, kind: input, shape index: {}]
  %s1 = inlined_call_operand.vmem [shape: f32[72,256], index: 1, kind: input, shape index: {}]
  %s2 = inlined_call_operand.vmem [shape: f32[1,256], index: 2, kind: input, shape index: {}]
  %s3 = inlined_call_operand.vmem [shape: f32[1,256], index: 3, kind: input, shape index: {}]
  %s4 = inlined_call_operand.vmem [shape: f32[2,128,256], index: 4, kind: output, shape index: {}]
  %s5 = sld [smem:[#allocation0]]
  $region49: #{deconv3d_block_forward.1} parent=0
    _
  %s7 = ssub.s32 1, %s5
  %s8 = scalar_select 0, %s7, %s5
  loop: start=0, step=1, limit=6
  $region2: #{deconv3d_block_forward.1} parent=0 // loop_pre_header
    _
  $region3: #{deconv3d_block_forward.1} parent=0 // loop_header
    %s10 = sphi 0, %s14
    %p11 = scmp.ge.s32.totalorder %s10, 6
    %s17 = sphi 0, %s29
    %s18 = sphi 0, %s25
    %s19 = sphi 0, %s17
    %s20 = sphi 0, %s18
    %s21 = sphi 0, %s19
    %s22 = sphi 0, %s20
    %s34 = sphi 0, %s36
    %s37 = sphi 0, %s34
    %s38 = sphi 0, %s37
    %s54 = sphi 0, %s38
    %s58 = sphi 0, %s58
    %s60 = sphi 0, %s58
    %s61 = sphi 0, %s60
    %s75 = sphi 0, %s61
    %s79 = sphi 0, %s79
    %s81 = sphi 0, %s79
    %s82 = sphi 0, %s81
    %s96 = sphi 0, %s82
    %s100 = sphi 0, %s100
    %s102 = sphi 0, %s100
    %s103 = sphi 0, %s102
    %s117 = sphi 0, %s103
    %s125 = sphi 0, %s127
    %s128 = sphi 0, %s125
    %s129 = sphi 0, %s128
    %s145 = sphi 0, %s129
  $region4: #{deconv3d_block_forward.1} parent=0 // loop_header_branch
    %13 = sbr.rel (%p11) target = $region8
  $region5: #{deconv3d_block_forward.1} parent=0 // loop_body
    %s15 = ssub.s32 %s10, 1
    %s16 = ssub.s32 %s10, 2
    %s23 = sadd.s32 1, %s18
    %p24 = scmp.ge.s32.totalorder %s23, 2
    %s25 = scalar_select %p24, 0, %s23
    %s26 = sadd.s32 1, %s17
    %s27 = scalar_select %p24, %s26, %s17
    %p28 = scmp.ge.s32.totalorder %s27, 2
    %s29 = scalar_select %p28, 0, %s27
    %s30 = ssub.s32 %s17, %s29
    %s31 = ssub.s32 %s18, %s25
    %s32 = sor.u32 %s30, %s31
    %p33 = scmp.eq.s32.totalorder %s32, 0
    %s35 = sadd.s32 %s34, 1
    %s36 = scalar_select %p33, %s34, %s35
    %p39 = pneg %p33
    %p40 = scmp.eq.s32.totalorder %s10, 3
    %p41 = por %p39, %p40
    %p42 = scmp.ne.s32.totalorder %s34, %s37
    %p43 = scmp.eq.s32.totalorder %s10, 0
    %p44 = por %p42, %p43
    %p45 = scmp.ne.s32.totalorder %s34, %s37
    %p46 = scmp.eq.s32.totalorder %s15, 3
    %p47 = por %p45, %p46
    %p48 = scmp.ne.s32.totalorder %s37, %s38
    %p49 = scmp.eq.s32.totalorder %s15, 0
    %p50 = por %p48, %p49
    %p51 = scmp.ne.s32.totalorder %s37, %s38
    %p52 = scmp.eq.s32.totalorder %s16, 3
    %p53 = por %p51, %p52
    %p55 = scmp.ne.s32.totalorder %s38, %s54
    %p56 = scmp.eq.s32.totalorder %s16, 0
    %p57 = por %p55, %p56
    %s59 = sadd.s32 %s58, 1
    %p62 = scmp.eq.s32.totalorder %s10, 3
    %p63 = scmp.ne.s32.totalorder %s58, %s60
    %p64 = scmp.eq.s32.totalorder %s10, 0
    %p65 = por %p63, %p64
    %p66 = scmp.ne.s32.totalorder %s58, %s60
    %p67 = scmp.eq.s32.totalorder %s15, 3
    %p68 = por %p66, %p67
    %p69 = scmp.ne.s32.totalorder %s60, %s61
    %p70 = scmp.eq.s32.totalorder %s15, 0
    %p71 = por %p69, %p70
    %p72 = scmp.ne.s32.totalorder %s60, %s61
    %p73 = scmp.eq.s32.totalorder %s16, 3
    %p74 = por %p72, %p73
    %p76 = scmp.ne.s32.totalorder %s61, %s75
    %p77 = scmp.eq.s32.totalorder %s16, 0
    %p78 = por %p76, %p77
    %s80 = sadd.s32 %s79, 1
    %p83 = scmp.eq.s32.totalorder %s10, 3
    %p84 = scmp.ne.s32.totalorder %s79, %s81
    %p85 = scmp.eq.s32.totalorder %s10, 0
    %p86 = por %p84, %p85
    %p87 = scmp.ne.s32.totalorder %s79, %s81
    %p88 = scmp.eq.s32.totalorder %s15, 3
    %p89 = por %p87, %p88
    %p90 = scmp.ne.s32.totalorder %s81, %s82
    %p91 = scmp.eq.s32.totalorder %s15, 0
    %p92 = por %p90, %p91
    %p93 = scmp.ne.s32.totalorder %s81, %s82
    %p94 = scmp.eq.s32.totalorder %s16, 3
    %p95 = por %p93, %p94
    %p97 = scmp.ne.s32.totalorder %s82, %s96
    %p98 = scmp.eq.s32.totalorder %s16, 0
    %p99 = por %p97, %p98
    %s101 = sadd.s32 %s100, 1
    %p104 = scmp.eq.s32.totalorder %s10, 3
    %p105 = scmp.ne.s32.totalorder %s100, %s102
    %p106 = scmp.eq.s32.totalorder %s10, 0
    %p107 = por %p105, %p106
    %p108 = scmp.ne.s32.totalorder %s100, %s102
    %p109 = scmp.eq.s32.totalorder %s15, 3
    %p110 = por %p108, %p109
    %p111 = scmp.ne.s32.totalorder %s102, %s103
    %p112 = scmp.eq.s32.totalorder %s15, 0
    %p113 = por %p111, %p112
    %p114 = scmp.ne.s32.totalorder %s102, %s103
    %p115 = scmp.eq.s32.totalorder %s16, 3
    %p116 = por %p114, %p115
    %p118 = scmp.ne.s32.totalorder %s103, %s117
    %p119 = scmp.eq.s32.totalorder %s16, 0
    %p120 = por %p118, %p119
    %s121 = ssub.s32 %s17, %s29
    %s122 = ssub.s32 %s18, %s25
    %s123 = sor.u32 %s121, %s122
    %p124 = scmp.eq.s32.totalorder %s123, 0
    %s126 = sadd.s32 %s125, 1
    %s127 = scalar_select %p124, %s125, %s126
    %p130 = pneg %p124
    %p131 = scmp.eq.s32.totalorder %s10, 3
    %p132 = por %p130, %p131
    %p133 = scmp.ne.s32.totalorder %s125, %s128
    %p134 = scmp.eq.s32.totalorder %s10, 0
    %p135 = por %p133, %p134
    %p136 = scmp.ne.s32.totalorder %s125, %s128
    %p137 = scmp.eq.s32.totalorder %s15, 3
    %p138 = por %p136, %p137
    %p139 = scmp.ne.s32.totalorder %s128, %s129
    %p140 = scmp.eq.s32.totalorder %s15, 0
    %p141 = por %p139, %p140
    %p142 = scmp.ne.s32.totalorder %s128, %s129
    %p143 = scmp.eq.s32.totalorder %s16, 3
    %p144 = por %p142, %p143
    %p146 = scmp.ne.s32.totalorder %s129, %s145
    %p147 = scmp.eq.s32.totalorder %s16, 0
    %p148 = por %p146, %p147
    %p149 = scmp.le.s32.totalorder 1, %s10
    %p150 = scmp.lt.s32.totalorder %s10, 5
    %p151 = pnand %p149, %p150
    %p152 = pneg %p151
    // Predicated region
    $region9: #{deconv3d_block_forward.1} parent=5 // pred_check
      _
    $region10: #{deconv3d_block_forward.1} parent=5 // pred_check_branch
      %154 = sbr.rel (%p151) target = $region12
    $region11: #{deconv3d_block_forward.1} parent=5 // pred_region
      %s155 = ssub.s32 %s10, 1
      // Predicated region
      $region13: #{deconv3d_block_forward.1} parent=11 // pred_check
        %p156 = pneg %p71
      $region14: #{deconv3d_block_forward.1} parent=11 // pred_check_branch
        %158 = sbr.rel (%p156) target = $region16
      $region15: #{deconv3d_block_forward.1} parent=11 // pred_region
        _
      $region16: #{deconv3d_block_forward.1} parent=11 // pred_fallthru
        _
      // Predicated region
      $region17: #{deconv3d_block_forward.1} parent=11 // pred_check
        %p159 = pneg %p92
      $region18: #{deconv3d_block_forward.1} parent=11 // pred_check_branch
        %161 = sbr.rel (%p159) target = $region20
      $region19: #{deconv3d_block_forward.1} parent=11 // pred_region
        _
      $region20: #{deconv3d_block_forward.1} parent=11 // pred_fallthru
        _
      // Predicated region
      $region21: #{deconv3d_block_forward.1} parent=11 // pred_check
        %p162 = pneg %p113
      $region22: #{deconv3d_block_forward.1} parent=11 // pred_check_branch
        %164 = sbr.rel (%p162) target = $region24
      $region23: #{deconv3d_block_forward.1} parent=11 // pred_region
        _
      $region24: #{deconv3d_block_forward.1} parent=11 // pred_fallthru
        _
    $region12: #{deconv3d_block_forward.1} parent=5 // pred_fallthru
      _
    %p165 = scmp.lt.s32.totalorder %s10, 4
    // Predicated region
    $region25: #{deconv3d_block_forward.1} parent=5 // pred_check
      %p166 = pneg %p165
    $region26: #{deconv3d_block_forward.1} parent=5 // pred_check_branch
      %168 = sbr.rel (%p166) target = $region28
    $region27: #{deconv3d_block_forward.1} parent=5 // pred_region
      // Predicated region
      $region29: #{deconv3d_block_forward.1} parent=27 // pred_check
        %p169 = pneg %p44
      $region30: #{deconv3d_block_forward.1} parent=27 // pred_check_branch
        %171 = sbr.rel (%p169) target = $region32
      $region31: #{deconv3d_block_forward.1} parent=27 // pred_region
        %s172 = smul.u32 8, %s18
        %p173 = scmp.lt.s32.totalorder %s17, 1
        %s174 = scalar_select %p173, %s17, 1
        %p175 = scmp.lt.s32.totalorder %s172, 15
        %s176 = scalar_select %p175, %s172, 15
        %s177 = smul.addr %s174, 16
        %s178 = sadd.s32 %s176, %s177
        %s179 = smul.addr %s178, 8
        %s180 = scalar_lea.vmem %s0, %s179
        %s181 = smul.u32 8, %s18
      $region32: #{deconv3d_block_forward.1} parent=27 // pred_fallthru
        _
    $region28: #{deconv3d_block_forward.1} parent=5 // pred_fallthru
      _
    %p182 = scmp.le.s32.totalorder 1, %s10
    %p183 = scmp.lt.s32.totalorder %s10, 5
    %p184 = pnand %p182, %p183
    %p185 = pneg %p184
    // Predicated region
    $region33: #{deconv3d_block_forward.1} parent=5 // pred_check
      _
    $region34: #{deconv3d_block_forward.1} parent=5 // pred_check_branch
      %187 = sbr.rel (%p184) target = $region36
    $region35: #{deconv3d_block_forward.1} parent=5 // pred_region
      %s188 = ssub.s32 %s10, 1
      %s189 = smul.u32 8, %s20
      %p190 = scmp.lt.s32.totalorder %s19, 1
      %s191 = scalar_select %p190, %s19, 1
      %p192 = scmp.lt.s32.totalorder %s189, 15
      %s193 = scalar_select %p192, %s189, 15
      %s194 = smul.addr %s191, 16
      %s195 = sadd.s32 %s193, %s194
      %s196 = smul.addr %s195, 8
      %s197 = scalar_lea.vmem %s0, %s196
      %p198 = pneg %p50
      %p199 = pneg %p47
      %p200 = pneg %p71
      %p201 = pneg %p68
      %p202 = pneg %p92
      %p203 = pneg %p89
      %p204 = pneg %p113
      %p205 = pneg %p110
      %p206 = pneg %p141
      %p207 = pneg %p138
      %s208 = smul.u32 8, %s20
      %p209 = scmp.lt.s32.totalorder %s19, 1
      %s210 = scalar_select %p209, %s19, 1
      %p211 = scmp.lt.s32.totalorder %s208, 15
      %s212 = scalar_select %p211, %s208, 15
      %s213 = smul.addr %s212, 2
      %s214 = smul.addr %s210, 32
      %s215 = sadd.s32 %s213, %s214
      %s216 = smul.addr %s215, 8
      %s217 = scalar_lea.vmem %s4, %s216
      %s218 = smul.u32 8, %s20
      %p219 = scmp.lt.s32.totalorder %s19, 1
      %s220 = scalar_select %p219, %s19, 1
      %p221 = scmp.lt.s32.totalorder %s218, 15
      %s222 = scalar_select %p221, %s218, 15
      %s223 = smul.addr %s220, 16
      %s224 = sadd.s32 %s222, %s223
      %s225 = smul.addr %s224, 8
      %s226 = scalar_lea.vmem %s0, %s225
      %s227 = smul.u32 8, %s20
      %s228 = smul.u32 8, %s20
      %p229 = scmp.lt.s32.totalorder %s19, 1
      %s230 = scalar_select %p229, %s19, 1
      %p231 = scmp.lt.s32.totalorder %s228, 15
      %s232 = scalar_select %p231, %s228, 15
      %s233 = smul.addr %s232, 2
      %s234 = smul.addr %s230, 32
      %s235 = sadd.s32 %s233, %s234
      %s236 = smul.addr %s235, 8
      %s237 = scalar_lea.vmem %s4, %s236
      %s238 = smul.u32 8, %s20
      %v239 = vld [vmem:[%s226] sm:$0xff]
      %v240 = vld [vmem:[%s226 + $0x8] sm:$0xff]
      %v241 = vld [vmem:[%s226 + $0x10] sm:$0xff]
      %v242 = vld [vmem:[%s226 + $0x18] sm:$0xff]
      %v243 = vld [vmem:[%s226 + $0x20] sm:$0xff]
      %v244 = vld [vmem:[%s226 + $0x28] sm:$0xff]
      %v245 = vld [vmem:[%s226 + $0x30] sm:$0xff]
      %v246 = vld [vmem:[%s226 + $0x38] sm:$0xff]
      %v247 = vld [vmem:[%s1] sm:$0xff]
      %v248 = vld [vmem:[%s1 + $0x8] sm:$0xff]
      %v249 = vld [vmem:[%s1 + $0x10] sm:$0xff]
      %v250 = vld [vmem:[%s1 + $0x18] sm:$0xff]
      %v251 = vld [vmem:[%s1 + $0x20] sm:$0xff]
      %v252 = vld [vmem:[%s1 + $0x28] sm:$0xff]
      %v253 = vld [vmem:[%s1 + $0x30] sm:$0xff]
      %v254 = vld [vmem:[%s1 + $0x38] sm:$0xff]
      %v255 = vld [vmem:[%s1 + $0x40] sm:$0xff]
      %v256 = vld [vmem:[%s1 + $0x48] sm:$0xff]
      %v257 = vld [vmem:[%s1 + $0x50] sm:$0xff]
      %v258 = vld [vmem:[%s1 + $0x58] sm:$0xff]
      %v259 = vld [vmem:[%s1 + $0x60] sm:$0xff]
      %v260 = vld [vmem:[%s1 + $0x68] sm:$0xff]
      %v261 = vld [vmem:[%s1 + $0x70] sm:$0xff]
      %v262 = vld [vmem:[%s1 + $0x78] sm:$0xff]
      %v263 = vld [vmem:[%s1 + $0x80] sm:$0xff]
      %v264 = vld [vmem:[%s1 + $0x88] sm:$0xff]
      %vm265 = vcmask 588800
      %v267 = vsel %vm265, %v239, 0
      %v270 = vsel %vm265, %v240, 0
      %v273 = vsel %vm265, %v241, 0
      %v276 = vsel %vm265, %v242, 0
      %v279 = vsel %vm265, %v243, 0
      %v282 = vsel %vm265, %v244, 0
      %v285 = vsel %vm265, %v245, 0
      %v288 = vsel %vm265, %v246, 0
      %290 = vmatprep.subr.mxu0 %v248
      %291 = vmatpush1.msra.mxu0 %v247
      %292 = vmatprep.subr.mxu0 %v250
      %293 = vmatpush1.msra.mxu0 %v249
      %294 = vmatprep.subr.mxu0 %v252
      %295 = vmatpush1.msra.mxu0 %v251
      %296 = vmatprep.subr.mxu0 %v254
      %297 = vmatpush1.msra.mxu0 %v253
      %298 = vmatprep.subr.mxu0 %v256
      %299 = vmatpush1.msra.mxu0 %v255
      %300 = vmatprep.subr.mxu0 %v258
      %301 = vmatpush1.msra.mxu0 %v257
      %302 = vmatprep.subr.mxu0 %v260
      %303 = vmatpush1.msra.mxu0 %v259
      %304 = vmatprep.subr.mxu0 %v262
      %305 = vmatpush1.msra.mxu0 %v261
      %306 = vmatprep.subr.mxu0 %v264
      %307 = vmatpush1.msra.mxu0 %v263
      %308 = vmatprep.subr.mxu0 0.0
      %309 = vmatpush1.msra.mxu0 0.0
      %310 = vmatprep.subr.mxu0 0.0
      %311 = vmatpush1.msra.mxu0 0.0
      %312 = vmatprep.subr.mxu0 0.0
      %313 = vmatpush1.msra.mxu0 0.0
      %314 = vmatprep.subr.mxu0 0.0
      %315 = vmatpush1.msra.mxu0 0.0
      %316 = vmatprep.subr.mxu0 0.0
      %317 = vmatpush1.msra.mxu0 0.0
      %318 = vmatprep.subr.mxu0 0.0
      %319 = vmatpush1.msra.mxu0 0.0
      %320 = vmatprep.subr.mxu0 0.0
      %321 = vmatpush1.msra.mxu0 0.0
      %322 = vmatprep.subr.mxu0 0.0
      %323 = vmatpush1.msra.mxu0 0.0
      %324 = vmatprep.subr.mxu0 0.0
      %325 = vmatpush1.msra.mxu0 0.0
      %326 = vmatprep.subr.mxu0 0.0
      %327 = vmatpush1.msra.mxu0 0.0
      %328 = vmatprep.subr.mxu0 0.0
      %329 = vmatpush1.msra.mxu0 0.0
      %330 = vmatprep.subr.mxu0 0.0
      %331 = vmatpush1.msra.mxu0 0.0
      %332 = vmatprep.subr.mxu0 0.0
      %333 = vmatpush1.msra.mxu0 0.0
      %334 = vmatprep.subr.mxu0 0.0
      %335 = vmatpush1.msra.mxu0 0.0
      %336 = vmatprep.subr.mxu0 0.0
      %337 = vmatpush1.msra.mxu0 0.0
      %338 = vmatprep.subr.mxu0 0.0
      %339 = vmatpush1.msra.mxu0 0.0
      %340 = vmatprep.subr.mxu0 0.0
      %341 = vmatpush1.msra.mxu0 0.0
      %342 = vmatprep.subr.mxu0 0.0
      %343 = vmatpush1.msra.mxu0 0.0
      %344 = vmatprep.subr.mxu0 0.0
      %345 = vmatpush1.msra.mxu0 0.0
      %346 = vmatprep.subr.mxu0 0.0
      %347 = vmatpush1.msra.mxu0 0.0
      %348 = vmatprep.subr.mxu0 0.0
      %349 = vmatpush1.msra.mxu0 0.0
      %350 = vmatprep.subr.mxu0 0.0
      %351 = vmatpush1.msra.mxu0 0.0
      %352 = vmatprep.subr.mxu0 0.0
      %353 = vmatpush1.msra.mxu0 0.0
      %354 = vmatprep.mubr.f32.mxu0 0.0
      %355 = vmatmul.mubr.f32.gmra.mrb[0].mxu0 %v267
      %v356 = vpop.f32.mrb[0].mxu0
      %v357 = vadd.f32 0.0, %v356
      %v358 = vpop.f32.mrb[0].mxu0
      %v359 = vadd.f32 0.0, %v358
      %360 = vmatprep.mubr.f32.mxu0 0.0
      %361 = vmatmul.mubr.f32.gmra.mrb[0].mxu0 %v270
      %v362 = vpop.f32.mrb[0].mxu0
      %v363 = vadd.f32 0.0, %v362
      %v364 = vpop.f32.mrb[0].mxu0
      %v365 = vadd.f32 0.0, %v364
      %366 = vmatprep.mubr.f32.mxu0 0.0
      %367 = vmatmul.mubr.f32.gmra.mrb[0].mxu0 %v273
      %v368 = vpop.f32.mrb[0].mxu0
      %v369 = vadd.f32 0.0, %v368
      %v370 = vpop.f32.mrb[0].mxu0
      %v371 = vadd.f32 0.0, %v370
      %372 = vmatprep.mubr.f32.mxu0 0.0
      %373 = vmatmul.mubr.f32.gmra.mrb[0].mxu0 %v276
      %v374 = vpop.f32.mrb[0].mxu0
      %v375 = vadd.f32 0.0, %v374
      %v376 = vpop.f32.mrb[0].mxu0
      %v377 = vadd.f32 0.0, %v376
      %378 = vmatprep.mubr.f32.mxu0 0.0
      %379 = vmatmul.mubr.f32.gmra.mrb[0].mxu0 %v279
      %v380 = vpop.f32.mrb[0].mxu0
      %v381 = vadd.f32 0.0, %v380
      %v382 = vpop.f32.mrb[0].mxu0
      %v383 = vadd.f32 0.0, %v382
      %384 = vmatprep.mubr.f32.mxu0 0.0
      %385 = vmatmul.mubr.f32.gmra.mrb[0].mxu0 %v282
      %v386 = vpop.f32.mrb[0].mxu0
      %v387 = vadd.f32 0.0, %v386
      %v388 = vpop.f32.mrb[0].mxu0
      %v389 = vadd.f32 0.0, %v388
      %390 = vmatprep.mubr.f32.mxu0 0.0
      %391 = vmatmul.mubr.f32.gmra.mrb[0].mxu0 %v285
      %v392 = vpop.f32.mrb[0].mxu0
      %v393 = vadd.f32 0.0, %v392
      %v394 = vpop.f32.mrb[0].mxu0
      %v395 = vadd.f32 0.0, %v394
      %396 = vmatprep.mubr.f32.mxu0 0.0
      %397 = vmatmul.mubr.f32.gmra.mrb[0].mxu0 %v288
      %v398 = vpop.f32.mrb[0].mxu0
      %v399 = vadd.f32 0.0, %v398
      %v400 = vpop.f32.mrb[0].mxu0
      %v401 = vadd.f32 0.0, %v400
      %402 = vdwg.mxu0
      %v403 = vld [vmem:[%s2] sm:$0x3]
      %v405 = vlaneseq
      %v406 = vshrl.u32 %v405, 7
      %v407 = vsub.s32 0, %v406
      %v408 = vrot.slane %v403, %v407
      %v409 = vlaneseq
      %v410 = vshrl.u32 %v409, 7
      %v411 = vsub.s32 1, %v410
      %v412 = vrot.slane %v403, %v411
      %v415 = vmul.f32 %v357, %v408
      %v416 = vmul.f32 %v359, %v412
      %v417 = vmul.f32 %v363, %v408
      %v418 = vmul.f32 %v365, %v412
      %v419 = vmul.f32 %v369, %v408
      %v420 = vmul.f32 %v371, %v412
      %v421 = vmul.f32 %v375, %v408
      %v422 = vmul.f32 %v377, %v412
      %v423 = vmul.f32 %v381, %v408
      %v424 = vmul.f32 %v383, %v412
      %v425 = vmul.f32 %v387, %v408
      %v426 = vmul.f32 %v389, %v412
      %v427 = vmul.f32 %v393, %v408
      %v428 = vmul.f32 %v395, %v412
      %v429 = vmul.f32 %v399, %v408
      %v430 = vmul.f32 %v401, %v412
      %v431 = vld [vmem:[%s3] sm:$0x3]
      %v433 = vlaneseq
      %v434 = vshrl.u32 %v433, 7
      %v435 = vsub.s32 0, %v434
      %v436 = vrot.slane %v431, %v435
      %v437 = vlaneseq
      %v438 = vshrl.u32 %v437, 7
      %v439 = vsub.s32 1, %v438
      %v440 = vrot.slane %v431, %v439
      %v443 = vadd.f32 %v415, %v436
      %v444 = vadd.f32 %v416, %v440
      %v445 = vadd.f32 %v417, %v436
      %v446 = vadd.f32 %v418, %v440
      %v447 = vadd.f32 %v419, %v436
      %v448 = vadd.f32 %v420, %v440
      %v449 = vadd.f32 %v421, %v436
      %v450 = vadd.f32 %v422, %v440
      %v451 = vadd.f32 %v423, %v436
      %v452 = vadd.f32 %v424, %v440
      %v453 = vadd.f32 %v425, %v436
      %v454 = vadd.f32 %v426, %v440
      %v455 = vadd.f32 %v427, %v436
      %v456 = vadd.f32 %v428, %v440
      %v457 = vadd.f32 %v429, %v436
      %v458 = vadd.f32 %v430, %v440
      %v459 = vmax.f32 %v443, 0.0
      %v460 = vmax.f32 %v444, 0.0
      %v461 = vmax.f32 %v445, 0.0
      %v462 = vmax.f32 %v446, 0.0
      %v463 = vmax.f32 %v447, 0.0
      %v464 = vmax.f32 %v448, 0.0
      %v465 = vmax.f32 %v449, 0.0
      %v466 = vmax.f32 %v450, 0.0
      %v467 = vmax.f32 %v451, 0.0
      %v468 = vmax.f32 %v452, 0.0
      %v469 = vmax.f32 %v453, 0.0
      %v470 = vmax.f32 %v454, 0.0
      %v471 = vmax.f32 %v455, 0.0
      %v472 = vmax.f32 %v456, 0.0
      %v473 = vmax.f32 %v457, 0.0
      %v474 = vmax.f32 %v458, 0.0
      %475 = vst [vmem:[%s237] sm:$0xff] %v459
      %476 = vst [vmem:[%s237 + $0x8] sm:$0xff] %v460
      %477 = vst [vmem:[%s237 + $0x10] sm:$0xff] %v461
      %478 = vst [vmem:[%s237 + $0x18] sm:$0xff] %v462
      %479 = vst [vmem:[%s237 + $0x20] sm:$0xff] %v463
      %480 = vst [vmem:[%s237 + $0x28] sm:$0xff] %v464
      %481 = vst [vmem:[%s237 + $0x30] sm:$0xff] %v465
      %482 = vst [vmem:[%s237 + $0x38] sm:$0xff] %v466
      %483 = vst [vmem:[%s237 + $0x40] sm:$0xff] %v467
      %484 = vst [vmem:[%s237 + $0x48] sm:$0xff] %v468
      %485 = vst [vmem:[%s237 + $0x50] sm:$0xff] %v469
      %486 = vst [vmem:[%s237 + $0x58] sm:$0xff] %v470
      %487 = vst [vmem:[%s237 + $0x60] sm:$0xff] %v471
      %488 = vst [vmem:[%s237 + $0x68] sm:$0xff] %v472
      %489 = vst [vmem:[%s237 + $0x70] sm:$0xff] %v473
      %490 = vst [vmem:[%s237 + $0x78] sm:$0xff] %v474
      %s491 = smul.u32 8, %s20
      %p492 = scmp.lt.s32.totalorder %s19, 1
      %s493 = scalar_select %p492, %s19, 1
      %p494 = scmp.lt.s32.totalorder %s491, 15
      %s495 = scalar_select %p494, %s491, 15
      %s496 = smul.addr %s495, 2
      %s497 = smul.addr %s493, 32
      %s498 = sadd.s32 %s496, %s497
      %s499 = smul.addr %s498, 8
      %s500 = scalar_lea.vmem %s4, %s499
      // Predicated region
      $region37: #{deconv3d_block_forward.1} parent=35 // pred_check
        %p501 = pneg %p138
      $region38: #{deconv3d_block_forward.1} parent=35 // pred_check_branch
        %503 = sbr.rel (%p501) target = $region40
      $region39: #{deconv3d_block_forward.1} parent=35 // pred_region
        %s504 = smul.u32 8, %s20
      $region40: #{deconv3d_block_forward.1} parent=35 // pred_fallthru
        _
    $region36: #{deconv3d_block_forward.1} parent=5 // pred_fallthru
      _
    %p505 = scmp.le.s32.totalorder 2, %s10
    // Predicated region
    $region41: #{deconv3d_block_forward.1} parent=5 // pred_check
      %p506 = pneg %p505
    $region42: #{deconv3d_block_forward.1} parent=5 // pred_check_branch
      %508 = sbr.rel (%p506) target = $region44
    $region43: #{deconv3d_block_forward.1} parent=5 // pred_region
      %s509 = ssub.s32 %s10, 2
      // Predicated region
      $region45: #{deconv3d_block_forward.1} parent=43 // pred_check
        %p510 = pneg %p144
      $region46: #{deconv3d_block_forward.1} parent=43 // pred_check_branch
        %512 = sbr.rel (%p510) target = $region48
      $region47: #{deconv3d_block_forward.1} parent=43 // pred_region
        %s513 = smul.u32 8, %s22
        %p514 = scmp.lt.s32.totalorder %s21, 1
        %s515 = scalar_select %p514, %s21, 1
        %p516 = scmp.lt.s32.totalorder %s513, 15
        %s517 = scalar_select %p516, %s513, 15
        %s518 = smul.addr %s517, 2
        %s519 = smul.addr %s515, 32
        %s520 = sadd.s32 %s518, %s519
        %s521 = smul.addr %s520, 8
        %s522 = scalar_lea.vmem %s4, %s521
      $region48: #{deconv3d_block_forward.1} parent=43 // pred_fallthru
        _
    $region44: #{deconv3d_block_forward.1} parent=5 // pred_fallthru
      _
  $region6: #{deconv3d_block_forward.1} parent=0 // loop_footer
    %s14 = sadd.s32 1, %s10
  $region7: #{deconv3d_block_forward.1} parent=0 // loop_footer_branch
    %9 = sbr.rel target = $region3
  $region8: #{deconv3d_block_forward.1} parent=0 // loop_exit
    _

</llo_original>
